<compile_context>
chip_gen: v7x
topology: tpu7x:2x2x1
jax: 0.10.0
libtpu: 0.0.40
codegen_flags: <defaults>
</compile_context>

<pallas_src>
import functools

import jax
import jax.numpy as jnp
import numpy as np
from jax.experimental import pallas as pl
from jax.experimental.pallas import tpu as pltpu


def _pad8(n: int) -> int:
  return ((n + 7) // 8) * 8


# ----------------------------------------------------------------------------
# In-kernel helpers
# ----------------------------------------------------------------------------
def _unpack_encoder(slab_ref, in_dims, hidden):
  """Slice one packed encoder slab into its parameter views.

  Slab layout (rows; every section starts at an 8-sublane-aligned offset):
    [w1 section per input: in_dims[k] rows, padded to a multiple of 8]
    [w2: hidden rows, padded to a multiple of 8]
    [bias block: 8 rows -> row0=b1, row1=b2, row2=w3^T, row3[0]=b3]
  """
  off = 0
  w1s = []
  for d in in_dims:
    w1s.append(slab_ref[off:off + d, :])
    off += _pad8(d)
  w2 = slab_ref[off:off + hidden, :]
  off += _pad8(hidden)
  bias_blk = slab_ref[off:off + 8, :]
  b1 = bias_blk[0:1, :]
  b2 = bias_blk[1:2, :]
  w3t = bias_blk[2:3, :]
  b3 = bias_blk[3:4, 0:1]
  return w1s, b1, w2, b2, w3t, b3


def _encoder_hidden(xs, w1s, b1, w2, b2):
  """2-layer ReLU MLP. The first layer sums per-input contributions (folds the
  torch concat([obs, action])); the bias is added last so the second matmul's
  contribution can accumulate in the MXU result buffer on v7x."""
  acc = jnp.dot(xs[0], w1s[0], preferred_element_type=jnp.float32)
  for x, w1 in zip(xs[1:], w1s[1:]):
    acc = acc + jnp.dot(x, w1, preferred_element_type=jnp.float32)
  h1 = jnp.maximum(acc + b1, 0.0)                                    # [TB, H]
  h2 = jnp.dot(h1, w2, preferred_element_type=jnp.float32) + b2
  return jnp.maximum(h2, 0.0)                                        # [TB, H]


def _head_row(h2, w3t, b3):
  """Linear(H, 1) head, lane-dense: contract H of w3t [1, H] with H of
  h2 [TB, H] -> [1, TB]; no explicit h2.T (no XLU transpose)."""
  row = jax.lax.dot_general(
      w3t, h2, dimension_numbers=(((1,), (1,)), ((), ())),
      preferred_element_type=jnp.float32)
  return row + b3


# ----------------------------------------------------------------------------
# Pallas kernels
# ----------------------------------------------------------------------------
def fused_logits_kernel(obs_ref, act_ref, next_ref, sa_ref, s_ref, out_ref,
                        *, obs_dim, act_dim, hidden):
  """Per batch tile, out_ref is a [3, TB] lane-dense slab:
     row 0: logits_sa   row 1: logits_s   row 2: logits_next_s."""
  obs = obs_ref[...]
  act = act_ref[...]
  nxt = next_ref[...]
  tb = obs.shape[0]

  sa_w1s, sa_b1, sa_w2, sa_b2, sa_w3t, sa_b3 = _unpack_encoder(
      sa_ref, (obs_dim, act_dim), hidden)
  s_w1s, s_b1, s_w2, s_b2, s_w3t, s_b3 = _unpack_encoder(
      s_ref, (obs_dim,), hidden)

  logits_sa = _head_row(
      _encoder_hidden((obs, act), sa_w1s, sa_b1, sa_w2, sa_b2), sa_w3t, sa_b3)

  # State encoder runs once on stacked [2*TB, OBS] (obs rows then next_obs
  # rows); split the activations at a sublane-aligned offset before the head.
  both = jnp.concatenate([obs, nxt], axis=0)
  h2_both = _encoder_hidden((both,), s_w1s, s_b1, s_w2, s_b2)       # [2TB, H]
  logits_s = _head_row(h2_both[:tb, :], s_w3t, s_b3)
  logits_next_s = _head_row(h2_both[tb:, :], s_w3t, s_b3)

  # Single lane-dense store of all three logits rows.
  out_ref[...] = jnp.concatenate([logits_sa, logits_s, logits_next_s], axis=0)


def forward_sa_kernel(obs_ref, act_ref, sa_ref, s_ref, out_ref,
                      *, obs_dim, act_dim, hidden):
  """forward(x, actions): row 0 = logits_sa, row 1 = logits_s (each [1, TB])."""
  obs = obs_ref[...]
  act = act_ref[...]
  sa_w1s, sa_b1, sa_w2, sa_b2, sa_w3t, sa_b3 = _unpack_encoder(
      sa_ref, (obs_dim, act_dim), hidden)
  s_w1s, s_b1, s_w2, s_b2, s_w3t, s_b3 = _unpack_encoder(
      s_ref, (obs_dim,), hidden)
  logits_sa = _head_row(
      _encoder_hidden((obs, act), sa_w1s, sa_b1, sa_w2, sa_b2), sa_w3t, sa_b3)
  logits_s = _head_row(
      _encoder_hidden((obs,), s_w1s, s_b1, s_w2, s_b2), s_w3t, s_b3)
  out_ref[...] = jnp.concatenate([logits_sa, logits_s], axis=0)


def forward_s_kernel(obs_ref, s_ref, out_ref, *, obs_dim, hidden):
  """forward(x): logits_s as a [1, TB] lane-dense row."""
  s_w1s, s_b1, s_w2, s_b2, s_w3t, s_b3 = _unpack_encoder(
      s_ref, (obs_dim,), hidden)
  out_ref[...] = _head_row(
      _encoder_hidden((obs_ref[...],), s_w1s, s_b1, s_w2, s_b2), s_w3t, s_b3)


# ----------------------------------------------------------------------------
# pallas_call plumbing
# ----------------------------------------------------------------------------
def _batch_tile(batch: int) -> int:
  # 128-wide lane-dense batch tiles when the batch allows it (unmasked vst,
  # aligned splits); otherwise the whole batch in one tile (demo sizes).
  return 128 if batch % 128 == 0 else batch


def _compiler_params():
  # The batch axis is embarrassingly parallel (softmax normalization lives
  # outside the kernel), so it can shard across v7x's two TensorCores.
  # Explicit VMEM limit leaves headroom against v7x's 64 MiB/TC.
  return pltpu.CompilerParams(
      dimension_semantics=("parallel",),
      vmem_limit_bytes=48 * 1024 * 1024)


# ----------------------------------------------------------------------------
# Parameter initialization (deterministic, PyTorch nn.Linear style) + packing
# ----------------------------------------------------------------------------
def _init_linear(key, fan_in, fan_out):
  bound = 1.0 / np.sqrt(fan_in)
  kw, kb = jax.random.split(key)
  w = jax.random.uniform(kw, (fan_in, fan_out), jnp.float32, -bound, bound)
  b = jax.random.uniform(kb, (1, fan_out), jnp.float32, -bound, bound)
  return w, b


def _pack_encoder(key, in_dims, hidden):
  """2-layer ReLU-MLP encoder + Linear(H, 1) head, packed into ONE
  [rows, hidden] f32 slab (single DMA). Returns (slab, raw_params)."""
  total_in = sum(in_dims)
  k1, k2, k3 = jax.random.split(key, 3)
  w1, b1 = _init_linear(k1, total_in, hidden)
  w2, b2 = _init_linear(k2, hidden, hidden)
  w3, b3 = _init_linear(k3, hidden, 1)

  rows = sum(_pad8(d) for d in in_dims) + _pad8(hidden) + 8
  slab = np.zeros((rows, hidden), np.float32)
  off, start = 0, 0
  for d in in_dims:
    slab[off:off + d, :] = np.asarray(w1[start:start + d])
    start += d
    off += _pad8(d)
  slab[off:off + hidden, :] = np.asarray(w2)
  off += _pad8(hidden)
  slab[off + 0, :] = np.asarray(b1).reshape(-1)
  slab[off + 1, :] = np.asarray(b2).reshape(-1)
  slab[off + 2, :] = np.asarray(w3).reshape(-1)        # head weight as a row
  slab[off + 3, 0] = float(np.asarray(b3).reshape(-1)[0])
  return jnp.asarray(slab), (w1, b1, w2, b2, w3, b3)


# ----------------------------------------------------------------------------
# MeanFlowConserveDiscrimanator (JAX / Pallas version)
# ----------------------------------------------------------------------------
class MeanFlowConserveDiscriminator:
  def __init__(self, key, obs_dim, action_size, hidden,
               discriminator_clip_ratio, discriminator_temp):
    self.obs_dim = int(obs_dim)
    self.act_dim = int(action_size)
    self.hidden = int(hidden)
    self.clip_ratio = float(discriminator_clip_ratio)
    self.temp = float(discriminator_temp)
    ksa, ks = jax.random.split(key)
    self.sa_slab, self.sa_raw = _pack_encoder(
        ksa, (self.obs_dim, self.act_dim), self.hidden)
    self.s_slab, self.s_raw = _pack_encoder(ks, (self.obs_dim,), self.hidden)

  # -- forward ---------------------------------------------------------------
  def forward(self, x, actions=None):
    if actions is not None:
      return self._forward_sa(x, actions)
    return self._forward_s(x)

  def _forward_sa(self, x, actions):
    B = x.shape[0]
    TB = _batch_tile(B)
    kernel = functools.partial(forward_sa_kernel, obs_dim=self.obs_dim,
                               act_dim=self.act_dim, hidden=self.hidden)
    packed = pl.pallas_call(
        kernel,
        out_shape=jax.ShapeDtypeStruct((2, B), jnp.float32),
        grid=(B // TB,),
        in_specs=[
            pl.BlockSpec((TB, self.obs_dim), lambda i: (i, 0)),
            pl.BlockSpec((TB, self.act_dim), lambda i: (i, 0)),
            pl.BlockSpec(self.sa_slab.shape, lambda i: (0, 0)),
            pl.BlockSpec(self.s_slab.shape, lambda i: (0, 0)),
        ],
        out_specs=pl.BlockSpec((2, TB), lambda i: (0, i)),
        compiler_params=_compiler_params(),
    )(x, actions, self.sa_slab, self.s_slab)
    return packed[0].reshape(B, 1), packed[1].reshape(B, 1)

  def _forward_s(self, x):
    B = x.shape[0]
    TB = _batch_tile(B)
    kernel = functools.partial(forward_s_kernel, obs_dim=self.obs_dim,
                               hidden=self.hidden)
    packed = pl.pallas_call(
        kernel,
        out_shape=jax.ShapeDtypeStruct((1, B), jnp.float32),
        grid=(B // TB,),
        in_specs=[
            pl.BlockSpec((TB, self.obs_dim), lambda i: (i, 0)),
            pl.BlockSpec(self.s_slab.shape, lambda i: (0, 0)),
        ],
        out_specs=pl.BlockSpec((1, TB), lambda i: (0, i)),
        compiler_params=_compiler_params(),
    )(x, self.s_slab)
    return packed.reshape(B, 1)

  # -- fused logits + XLA-side normalization ---------------------------------
  def compute_normalized_ratio_and_logits(self, observation, actions,
                                          next_observation):
    B = observation.shape[0]
    TB = _batch_tile(B)
    kernel = functools.partial(fused_logits_kernel, obs_dim=self.obs_dim,
                               act_dim=self.act_dim, hidden=self.hidden)
    packed = pl.pallas_call(
        kernel,
        out_shape=jax.ShapeDtypeStruct((3, B), jnp.float32),
        grid=(B // TB,),
        in_specs=[
            pl.BlockSpec((TB, self.obs_dim), lambda i: (i, 0)),
            pl.BlockSpec((TB, self.act_dim), lambda i: (i, 0)),
            pl.BlockSpec((TB, self.obs_dim), lambda i: (i, 0)),
            pl.BlockSpec(self.sa_slab.shape, lambda i: (0, 0)),
            pl.BlockSpec(self.s_slab.shape, lambda i: (0, 0)),
        ],
        out_specs=pl.BlockSpec((3, TB), lambda i: (0, i)),
        compiler_params=_compiler_params(),
    )(observation, actions, next_observation, self.sa_slab, self.s_slab)

    logits_sa = packed[0].reshape(B, 1)
    logits_s = packed[1].reshape(B, 1)
    logits_next_s = packed[2].reshape(B, 1)

    # Batch-coupled softmax normalization stays in XLA (exact, O(B) work): it
    # keeps the batch grid axis "parallel"/tile-safe, and the ratios sum to
    # exactly 1 (matters if they feed an importance-weighted loss).
    clip_val = 1.0 + self.clip_ratio
    logits = logits_sa + logits_s
    normalized_dsa_ratio = jax.nn.softmax(
        jnp.clip(logits, -clip_val, clip_val) / self.temp, axis=0)
    normalized_ds_ratio = jax.nn.softmax(
        jnp.clip(logits_s, -clip_val, clip_val) / self.temp, axis=0)
    return (normalized_dsa_ratio, normalized_ds_ratio,
            logits_sa, logits_s, logits_next_s)


# ----------------------------------------------------------------------------
# Pure-JAX reference for correctness checks
# ----------------------------------------------------------------------------
def ref_encoder_logits(xs, params):
  w1, b1, w2, b2, w3, b3 = params
  x = jnp.concatenate(xs, axis=-1) if len(xs) > 1 else xs[0]
  h1 = jnp.maximum(x @ w1 + b1, 0.0)
  h2 = jnp.maximum(h1 @ w2 + b2, 0.0)
  return h2 @ w3 + b3


def ref_clip_softmax(logits, clip_ratio, temp):
  z = jnp.clip(logits, -(1.0 + clip_ratio), 1.0 + clip_ratio) / temp
  return jax.nn.softmax(z, axis=0)


if __name__ == "__main__":
  B = 8          # batch
  OBS = 16       # observation dim
  ACT = 4        # action dim
  HID = 32       # encoder hidden / feature size
  CLIP = 0.5
  TEMP = 1.0

  root = jax.random.PRNGKey(0)
  k_params, k_obs, k_act, k_next = jax.random.split(root, 4)

  disc = MeanFlowConserveDiscriminator(
      k_params, obs_dim=OBS, action_size=ACT, hidden=HID,
      discriminator_clip_ratio=CLIP, discriminator_temp=TEMP)

  obs = jax.random.normal(k_obs, (B, OBS), jnp.float32)
  actions = jax.random.normal(k_act, (B, ACT), jnp.float32)
  next_obs = jax.random.normal(k_next, (B, OBS), jnp.float32)

  # forward() paths (separate kernels).
  fwd_sa, fwd_s = disc.forward(obs, actions)
  fwd_next_s = disc.forward(next_obs)

  # Fused path (single pallas_call for all three logits heads).
  outs = disc.compute_normalized_ratio_and_logits(obs, actions, next_obs)
  outs = jax.block_until_ready(outs)
  dsa_ratio, ds_ratio, logits_sa, logits_s, logits_next_s = outs

  # References.
  r_sa = ref_encoder_logits((obs, actions), disc.sa_raw)
  r_s = ref_encoder_logits((obs,), disc.s_raw)
  r_next_s = ref_encoder_logits((next_obs,), disc.s_raw)
  r_dsa = ref_clip_softmax(r_sa + r_s, CLIP, TEMP)
  r_ds = ref_clip_softmax(r_s, CLIP, TEMP)

  for got, want in ((fwd_sa, r_sa), (fwd_s, r_s), (fwd_next_s, r_next_s),
                    (logits_sa, r_sa), (logits_s, r_s),
                    (logits_next_s, r_next_s),
                    (dsa_ratio, r_dsa), (ds_ratio, r_ds)):
    np.testing.assert_allclose(np.asarray(got), np.asarray(want),
                               rtol=1e-5, atol=1e-5)

  print("KERNEL_OK")
</pallas_src>

<mosaic_0001>
module attributes {stable_mosaic.version = 11 : i64} {
  func.func @forward_sa_kernel(%arg0: i32, %arg1: memref<8x16xf32, #tpu.memory_space<vmem>>, %arg2: memref<8x4xf32, #tpu.memory_space<vmem>>, %arg3: memref<64x32xf32, #tpu.memory_space<vmem>>, %arg4: memref<56x32xf32, #tpu.memory_space<vmem>>, %arg5: memref<2x8xf32, #tpu.memory_space<vmem>>) attributes {dimension_semantics = [#tpu.dimension_semantics<parallel>], iteration_bounds = array<i64: 1>, scalar_prefetch = 0 : i64, scratch_operands = 0 : i64, tpu.core_type = #tpu.core_type<tc>, window_params = [{transform_indices = @transform_0, window_bounds = array<i64: 8, 16>}, {transform_indices = @transform_1, window_bounds = array<i64: 8, 4>}, {pipeline_mode = #tpu.pipeline_mode<synchronous>, transform_indices = @transform_2, window_bounds = array<i64: 64, 32>}, {pipeline_mode = #tpu.pipeline_mode<synchronous>, transform_indices = @transform_3, window_bounds = array<i64: 56, 32>}, {transform_indices = @transform_4, window_bounds = array<i64: 2, 8>}]} {
    %c0 = arith.constant 0 : index
    %c0_0 = arith.constant 0 : index
    %0 = vector.load %arg1[%c0, %c0_0] : memref<8x16xf32, #tpu.memory_space<vmem>>, vector<8x16xf32>
    %c0_1 = arith.constant 0 : index
    %c0_2 = arith.constant 0 : index
    %1 = vector.load %arg2[%c0_1, %c0_2] : memref<8x4xf32, #tpu.memory_space<vmem>>, vector<8x4xf32>
    %c0_3 = arith.constant 0 : index
    %c0_4 = arith.constant 0 : index
    %2 = vector.load %arg3[%c0_3, %c0_4] : memref<64x32xf32, #tpu.memory_space<vmem>>, vector<16x32xf32>
    %c16 = arith.constant 16 : index
    %c0_5 = arith.constant 0 : index
    %3 = vector.load %arg3[%c16, %c0_5] : memref<64x32xf32, #tpu.memory_space<vmem>>, vector<4x32xf32>
    %c24 = arith.constant 24 : index
    %c0_6 = arith.constant 0 : index
    %4 = vector.load %arg3[%c24, %c0_6] : memref<64x32xf32, #tpu.memory_space<vmem>>, vector<32x32xf32>
    %c56 = arith.constant 56 : index
    %c0_7 = arith.constant 0 : index
    %5 = vector.load %arg3[%c56, %c0_7] : memref<64x32xf32, #tpu.memory_space<vmem>>, vector<8x32xf32>
    %6 = vector.extract_strided_slice %5 {offsets = [0, 0], sizes = [1, 32], strides = [1, 1]} : vector<8x32xf32> to vector<1x32xf32>
    %7 = vector.extract_strided_slice %5 {offsets = [1, 0], sizes = [1, 32], strides = [1, 1]} : vector<8x32xf32> to vector<1x32xf32>
    %8 = vector.extract_strided_slice %5 {offsets = [2, 0], sizes = [1, 32], strides = [1, 1]} : vector<8x32xf32> to vector<1x32xf32>
    %9 = vector.extract_strided_slice %5 {offsets = [3, 0], sizes = [1, 1], strides = [1, 1]} : vector<8x32xf32> to vector<1x1xf32>
    %c0_8 = arith.constant 0 : index
    %c0_9 = arith.constant 0 : index
    %10 = vector.load %arg4[%c0_8, %c0_9] : memref<56x32xf32, #tpu.memory_space<vmem>>, vector<16x32xf32>
    %c16_10 = arith.constant 16 : index
    %c0_11 = arith.constant 0 : index
    %11 = vector.load %arg4[%c16_10, %c0_11] : memref<56x32xf32, #tpu.memory_space<vmem>>, vector<32x32xf32>
    %c48 = arith.constant 48 : index
    %c0_12 = arith.constant 0 : index
    %12 = vector.load %arg4[%c48, %c0_12] : memref<56x32xf32, #tpu.memory_space<vmem>>, vector<8x32xf32>
    %13 = vector.extract_strided_slice %12 {offsets = [0, 0], sizes = [1, 32], strides = [1, 1]} : vector<8x32xf32> to vector<1x32xf32>
    %14 = vector.extract_strided_slice %12 {offsets = [1, 0], sizes = [1, 32], strides = [1, 1]} : vector<8x32xf32> to vector<1x32xf32>
    %15 = vector.extract_strided_slice %12 {offsets = [2, 0], sizes = [1, 32], strides = [1, 1]} : vector<8x32xf32> to vector<1x32xf32>
    %16 = vector.extract_strided_slice %12 {offsets = [3, 0], sizes = [1, 1], strides = [1, 1]} : vector<8x32xf32> to vector<1x1xf32>
    %cst = arith.constant dense<0.000000e+00> : vector<8x32xf32>
    %17 = tpu.matmul %0, %2, %cst {dimension_numbers = #tpu.dot_dimension_numbers<[1], [0], [0], [1], [0, 0, 1, 1], [], []>} : vector<8x16xf32>, vector<16x32xf32>, vector<8x32xf32> -> vector<8x32xf32>
    %cst_13 = arith.constant dense<0.000000e+00> : vector<8x32xf32>
    %18 = tpu.matmul %1, %3, %cst_13 {dimension_numbers = #tpu.dot_dimension_numbers<[1], [0], [0], [1], [0, 0, 1, 1], [], []>} : vector<8x4xf32>, vector<4x32xf32>, vector<8x32xf32> -> vector<8x32xf32>
    %19 = arith.addf %17, %18 : vector<8x32xf32>
    %20 = vector.broadcast %6 : vector<1x32xf32> to vector<8x32xf32>
    %21 = arith.addf %19, %20 : vector<8x32xf32>
    %cst_14 = arith.constant 0.000000e+00 : f32
    %22 = vector.broadcast %cst_14 : f32 to vector<8x32xf32>
    %23 = arith.maximumf %21, %22 : vector<8x32xf32>
    %cst_15 = arith.constant dense<0.000000e+00> : vector<8x32xf32>
    %24 = tpu.matmul %23, %4, %cst_15 {dimension_numbers = #tpu.dot_dimension_numbers<[1], [0], [0], [1], [0, 0, 1, 1], [], []>} : vector<8x32xf32>, vector<32x32xf32>, vector<8x32xf32> -> vector<8x32xf32>
    %25 = vector.broadcast %7 : vector<1x32xf32> to vector<8x32xf32>
    %26 = arith.addf %24, %25 : vector<8x32xf32>
    %cst_16 = arith.constant 0.000000e+00 : f32
    %27 = vector.broadcast %cst_16 : f32 to vector<8x32xf32>
    %28 = arith.maximumf %26, %27 : vector<8x32xf32>
    %cst_17 = arith.constant dense<0.000000e+00> : vector<1x8xf32>
    %29 = tpu.matmul %8, %28, %cst_17 {dimension_numbers = #tpu.dot_dimension_numbers<[1], [1], [0], [0], [0, 0, 1, 0], [], []>} : vector<1x32xf32>, vector<8x32xf32>, vector<1x8xf32> -> vector<1x8xf32>
    %30 = vector.broadcast %9 : vector<1x1xf32> to vector<1x8xf32>
    %31 = arith.addf %29, %30 : vector<1x8xf32>
    %cst_18 = arith.constant dense<0.000000e+00> : vector<8x32xf32>
    %32 = tpu.matmul %0, %10, %cst_18 {dimension_numbers = #tpu.dot_dimension_numbers<[1], [0], [0], [1], [0, 0, 1, 1], [], []>} : vector<8x16xf32>, vector<16x32xf32>, vector<8x32xf32> -> vector<8x32xf32>
    %33 = vector.broadcast %13 : vector<1x32xf32> to vector<8x32xf32>
    %34 = arith.addf %32, %33 : vector<8x32xf32>
    %cst_19 = arith.constant 0.000000e+00 : f32
    %35 = vector.broadcast %cst_19 : f32 to vector<8x32xf32>
    %36 = arith.maximumf %34, %35 : vector<8x32xf32>
    %cst_20 = arith.constant dense<0.000000e+00> : vector<8x32xf32>
    %37 = tpu.matmul %36, %11, %cst_20 {dimension_numbers = #tpu.dot_dimension_numbers<[1], [0], [0], [1], [0, 0, 1, 1], [], []>} : vector<8x32xf32>, vector<32x32xf32>, vector<8x32xf32> -> vector<8x32xf32>
    %38 = vector.broadcast %14 : vector<1x32xf32> to vector<8x32xf32>
    %39 = arith.addf %37, %38 : vector<8x32xf32>
    %cst_21 = arith.constant 0.000000e+00 : f32
    %40 = vector.broadcast %cst_21 : f32 to vector<8x32xf32>
    %41 = arith.maximumf %39, %40 : vector<8x32xf32>
    %cst_22 = arith.constant dense<0.000000e+00> : vector<1x8xf32>
    %42 = tpu.matmul %15, %41, %cst_22 {dimension_numbers = #tpu.dot_dimension_numbers<[1], [1], [0], [0], [0, 0, 1, 0], [], []>} : vector<1x32xf32>, vector<8x32xf32>, vector<1x8xf32> -> vector<1x8xf32>
    %43 = vector.broadcast %16 : vector<1x1xf32> to vector<1x8xf32>
    %44 = arith.addf %42, %43 : vector<1x8xf32>
    %45 = tpu.concatenate %31, %44 in 0 : vector<1x8xf32>, vector<1x8xf32> -> vector<2x8xf32>
    %c0_23 = arith.constant 0 : index
    %c0_24 = arith.constant 0 : index
    %46 = vector.load %arg5[%c0_23, %c0_24] : memref<2x8xf32, #tpu.memory_space<vmem>>, vector<2x8xf32>
    tpu.vector_store %arg5[%c0_23, %c0_24], %45 {strides = array<i32>} : memref<2x8xf32, #tpu.memory_space<vmem>>, vector<2x8xf32>,
    return
  }
  func.func @transform_0(%arg0: i32) -> (i32, i32) {
    %c0_i32 = arith.constant 0 : i32
    %c0_i32_0 = arith.constant 0 : i32
    return %arg0, %c0_i32 : i32, i32
  }
  func.func @transform_1(%arg0: i32) -> (i32, i32) {
    %c0_i32 = arith.constant 0 : i32
    %c0_i32_0 = arith.constant 0 : i32
    return %arg0, %c0_i32 : i32, i32
  }
  func.func @transform_2(%arg0: i32) -> (i32, i32) {
    %c0_i32 = arith.constant 0 : i32
    %c0_i32_0 = arith.constant 0 : i32
    %c0_i32_1 = arith.constant 0 : i32
    return %c0_i32, %c0_i32_0 : i32, i32
  }
  func.func @transform_3(%arg0: i32) -> (i32, i32) {
    %c0_i32 = arith.constant 0 : i32
    %c0_i32_0 = arith.constant 0 : i32
    %c0_i32_1 = arith.constant 0 : i32
    return %c0_i32, %c0_i32_0 : i32, i32
  }
  func.func @transform_4(%arg0: i32) -> (i32, i32) {
    %c0_i32 = arith.constant 0 : i32
    %c0_i32_0 = arith.constant 0 : i32
    return %c0_i32, %arg0 : i32, i32
  }
}

</mosaic_0001>

<llo_original>
// kernel: tpu_custom_call.1
$region0: #{tpu_custom_call.1}
  #allocation0 [shape = 'u32[]', space=smem, size = 0x4, offset = 0x4, fixed_abs, tag = 'smem constant byte address 0x4 - core index']
  #allocation1 [shape = 'u32[144,128]{1,0:T(1,128)}', space=vmem, size = 0x12000, scoped, tag = 'internal scratch']
  %s0 = inlined_call_operand.vmem [shape: f32[8,16], index: 0, kind: input, shape index: {}]
  %s1 = inlined_call_operand.vmem [shape: f32[8,4], index: 1, kind: input, shape index: {}]
  %s2 = inlined_call_operand.vmem [shape: f32[64,32], index: 2, kind: input, shape index: {}]
  %s3 = inlined_call_operand.vmem [shape: f32[56,32], index: 3, kind: input, shape index: {}]
  %s4 = inlined_call_operand.hbm [shape: f32[2,8], index: 4, kind: output, shape index: {}]
  %s5 = sld [smem:[#allocation0]]
  $region26: #{tpu_custom_call.1} parent=0
    _
  %s7 = ssub.s32 1, %s5
  %s8 = scalar_select 0, %s7, %s5
  $region1: #{tpu_custom_call.1} parent=0
    #allocation2 [shape = 'u8[1024]{0}', space=vmem, size = 0x400, scoped, tag = 'output window, operand 0, single buffered']
    #allocation3 [shape = 's32[1]{0}', space=sflag, size = 0x4, scoped, tag = 'scoped memory for tpu_custom_call.1']
    %9 = vsyncpa [#allocation3], 0
    // Predicated region
    $region2: #{tpu_custom_call.1} parent=1 // pred_check
      _
    $region3: #{tpu_custom_call.1} parent=1 // pred_check_branch
      %11 = sbr.rel (0) target = $region5
    $region4: #{tpu_custom_call.1} parent=1 // pred_region
      _
    $region5: #{tpu_custom_call.1} parent=1 // pred_fallthru
      _
    // Predicated region
    $region6: #{tpu_custom_call.1} parent=1 // pred_check
      _
    $region7: #{tpu_custom_call.1} parent=1 // pred_check_branch
      %13 = sbr.rel (0) target = $region9
    $region8: #{tpu_custom_call.1} parent=1 // pred_region
      _
    $region9: #{tpu_custom_call.1} parent=1 // pred_fallthru
      _
    // Predicated region
    $region10: #{tpu_custom_call.1} parent=1 // pred_check
      _
    $region11: #{tpu_custom_call.1} parent=1 // pred_check_branch
      %15 = sbr.rel (0) target = $region13
    $region12: #{tpu_custom_call.1} parent=1 // pred_region
      _
    $region13: #{tpu_custom_call.1} parent=1 // pred_fallthru
      _
    // Predicated region
    $region14: #{tpu_custom_call.1} parent=1 // pred_check
      _
    $region15: #{tpu_custom_call.1} parent=1 // pred_check_branch
      %17 = sbr.rel (0) target = $region17
    $region16: #{tpu_custom_call.1} parent=1 // pred_region
      _
    $region17: #{tpu_custom_call.1} parent=1 // pred_fallthru
      _
    %v18 = vld [vmem:[%s0] sm:$0xff]
    %v19 = vld [vmem:[%s1] sm:$0xff]
    %v20 = vld [vmem:[%s2] sm:$0xff]
    %v21 = vld [vmem:[%s2 + $0x8] sm:$0xff]
    %v22 = vld [vmem:[%s2 + $0x10] sm:$0xf]
    %v23 = vld [vmem:[%s2 + $0x18] sm:$0xff]
    %v24 = vld [vmem:[%s2 + $0x20] sm:$0xff]
    %v25 = vld [vmem:[%s2 + $0x28] sm:$0xff]
    %v26 = vld [vmem:[%s2 + $0x30] sm:$0xff]
    %v27 = vld [vmem:[%s2 + $0x38] sm:$0xff]
    %v28 = vld [vmem:[%s3] sm:$0xff]
    %v29 = vld [vmem:[%s3 + $0x8] sm:$0xff]
    %v30 = vld [vmem:[%s3 + $0x10] sm:$0xff]
    %v31 = vld [vmem:[%s3 + $0x18] sm:$0xff]
    %v32 = vld [vmem:[%s3 + $0x20] sm:$0xff]
    %v33 = vld [vmem:[%s3 + $0x28] sm:$0xff]
    %v34 = vld [vmem:[%s3 + $0x30] sm:$0xff]
    %vm35 = vcmask 31744
    %v37 = vsel %vm35, %v19, 0
    %vm39 = vcmask 1043456
    %v41 = vsel %vm39, %v22, 0
    %43 = vmatprep.subr.mxu0 0.0
    %44 = vmatpush1.msra.mxu0 %v41
    %45 = vmatprep.subr.mxu0 0.0
    %46 = vmatpush1.msra.mxu0 0.0
    %47 = vmatprep.subr.mxu0 0.0
    %48 = vmatpush1.msra.mxu0 0.0
    %49 = vmatprep.subr.mxu0 0.0
    %50 = vmatpush1.msra.mxu0 0.0
    %51 = vmatprep.subr.mxu0 0.0
    %52 = vmatpush1.msra.mxu0 0.0
    %53 = vmatprep.subr.mxu0 0.0
    %54 = vmatpush1.msra.mxu0 0.0
    %55 = vmatprep.subr.mxu0 0.0
    %56 = vmatpush1.msra.mxu0 0.0
    %57 = vmatprep.subr.mxu0 0.0
    %58 = vmatpush1.msra.mxu0 0.0
    %59 = vmatprep.subr.mxu0 0.0
    %60 = vmatpush1.msra.mxu0 0.0
    %61 = vmatprep.subr.mxu0 0.0
    %62 = vmatpush1.msra.mxu0 0.0
    %63 = vmatprep.subr.mxu0 0.0
    %64 = vmatpush1.msra.mxu0 0.0
    %65 = vmatprep.subr.mxu0 0.0
    %66 = vmatpush1.msra.mxu0 0.0
    %67 = vmatprep.subr.mxu0 0.0
    %68 = vmatpush1.msra.mxu0 0.0
    %69 = vmatprep.subr.mxu0 0.0
    %70 = vmatpush1.msra.mxu0 0.0
    %71 = vmatprep.subr.mxu0 0.0
    %72 = vmatpush1.msra.mxu0 0.0
    %73 = vmatprep.subr.mxu0 0.0
    %74 = vmatpush1.msra.mxu0 0.0
    %75 = vmatprep.subr.mxu0 0.0
    %76 = vmatpush1.msra.mxu0 0.0
    %77 = vmatprep.subr.mxu0 0.0
    %78 = vmatpush1.msra.mxu0 0.0
    %79 = vmatprep.subr.mxu0 0.0
    %80 = vmatpush1.msra.mxu0 0.0
    %81 = vmatprep.subr.mxu0 0.0
    %82 = vmatpush1.msra.mxu0 0.0
    %83 = vmatprep.subr.mxu0 0.0
    %84 = vmatpush1.msra.mxu0 0.0
    %85 = vmatprep.subr.mxu0 0.0
    %86 = vmatpush1.msra.mxu0 0.0
    %87 = vmatprep.subr.mxu0 0.0
    %88 = vmatpush1.msra.mxu0 0.0
    %89 = vmatprep.subr.mxu0 0.0
    %90 = vmatpush1.msra.mxu0 0.0
    %91 = vmatprep.subr.mxu0 0.0
    %92 = vmatpush1.msra.mxu0 0.0
    %93 = vmatprep.subr.mxu0 0.0
    %94 = vmatpush1.msra.mxu0 0.0
    %95 = vmatprep.subr.mxu0 0.0
    %96 = vmatpush1.msra.mxu0 0.0
    %97 = vmatprep.subr.mxu0 0.0
    %98 = vmatpush1.msra.mxu0 0.0
    %99 = vmatprep.subr.mxu0 0.0
    %100 = vmatpush1.msra.mxu0 0.0
    %101 = vmatprep.subr.mxu0 0.0
    %102 = vmatpush1.msra.mxu0 0.0
    %103 = vmatprep.subr.mxu0 0.0
    %104 = vmatpush1.msra.mxu0 0.0
    %105 = vmatprep.subr.mxu0 0.0
    %106 = vmatpush1.msra.mxu0 0.0
    %107 = vmatprep.mubr.f32.mxu0 0.0
    %108 = vmatmul.mubr.f32.gmra.mrb[0].mxu0 %v37
    %v109 = vpop.f32.mrb[0].mxu0
    %v110 = vadd.f32 0.0, %v109
    %v111 = vpop.f32.mrb[0].mxu0
    %112 = vdwg.mxu0
    %vm113 = vcmask 130048
    %v115 = vsel %vm113, %v18, 0
    %117 = vmatprep.subr.mxu0 0.0
    %118 = vmatpush1.msra.mxu0 %v20
    %119 = vmatprep.subr.mxu0 0.0
    %120 = vmatpush1.msra.mxu0 %v21
    %121 = vmatprep.subr.mxu0 0.0
    %122 = vmatpush1.msra.mxu0 0.0
    %123 = vmatprep.subr.mxu0 0.0
    %124 = vmatpush1.msra.mxu0 0.0
    %125 = vmatprep.subr.mxu0 0.0
    %126 = vmatpush1.msra.mxu0 0.0
    %127 = vmatprep.subr.mxu0 0.0
    %128 = vmatpush1.msra.mxu0 0.0
    %129 = vmatprep.subr.mxu0 0.0
    %130 = vmatpush1.msra.mxu0 0.0
    %131 = vmatprep.subr.mxu0 0.0
    %132 = vmatpush1.msra.mxu0 0.0
    %133 = vmatprep.subr.mxu0 0.0
    %134 = vmatpush1.msra.mxu0 0.0
    %135 = vmatprep.subr.mxu0 0.0
    %136 = vmatpush1.msra.mxu0 0.0
    %137 = vmatprep.subr.mxu0 0.0
    %138 = vmatpush1.msra.mxu0 0.0
    %139 = vmatprep.subr.mxu0 0.0
    %140 = vmatpush1.msra.mxu0 0.0
    %141 = vmatprep.subr.mxu0 0.0
    %142 = vmatpush1.msra.mxu0 0.0
    %143 = vmatprep.subr.mxu0 0.0
    %144 = vmatpush1.msra.mxu0 0.0
    %145 = vmatprep.subr.mxu0 0.0
    %146 = vmatpush1.msra.mxu0 0.0
    %147 = vmatprep.subr.mxu0 0.0
    %148 = vmatpush1.msra.mxu0 0.0
    %149 = vmatprep.subr.mxu0 0.0
    %150 = vmatpush1.msra.mxu0 0.0
    %151 = vmatprep.subr.mxu0 0.0
    %152 = vmatpush1.msra.mxu0 0.0
    %153 = vmatprep.subr.mxu0 0.0
    %154 = vmatpush1.msra.mxu0 0.0
    %155 = vmatprep.subr.mxu0 0.0
    %156 = vmatpush1.msra.mxu0 0.0
    %157 = vmatprep.subr.mxu0 0.0
    %158 = vmatpush1.msra.mxu0 0.0
    %159 = vmatprep.subr.mxu0 0.0
    %160 = vmatpush1.msra.mxu0 0.0
    %161 = vmatprep.subr.mxu0 0.0
    %162 = vmatpush1.msra.mxu0 0.0
    %163 = vmatprep.subr.mxu0 0.0
    %164 = vmatpush1.msra.mxu0 0.0
    %165 = vmatprep.subr.mxu0 0.0
    %166 = vmatpush1.msra.mxu0 0.0
    %167 = vmatprep.subr.mxu0 0.0
    %168 = vmatpush1.msra.mxu0 0.0
    %169 = vmatprep.subr.mxu0 0.0
    %170 = vmatpush1.msra.mxu0 0.0
    %171 = vmatprep.subr.mxu0 0.0
    %172 = vmatpush1.msra.mxu0 0.0
    %173 = vmatprep.subr.mxu0 0.0
    %174 = vmatpush1.msra.mxu0 0.0
    %175 = vmatprep.subr.mxu0 0.0
    %176 = vmatpush1.msra.mxu0 0.0
    %177 = vmatprep.subr.mxu0 0.0
    %178 = vmatpush1.msra.mxu0 0.0
    %179 = vmatprep.subr.mxu0 0.0
    %180 = vmatpush1.msra.mxu0 0.0
    %181 = vmatprep.mubr.f32.mxu0 0.0
    %182 = vmatmul.mubr.f32.gmra.mrb[0].mxu0 %v115
    %v183 = vpop.f32.mrb[0].mxu0
    %v184 = vadd.f32 %v110, %v183
    %v185 = vpop.f32.mrb[0].mxu0
    %186 = vdwg.mxu0
    %v187 = vlaneseq
    %v188 = vshrl.u32 %v187, 7
    %v189 = vsub.s32 0, %v188
    %v190 = vrot.slane %v27, %v189
    %v191 = vadd.f32 %v184, %v190
    %v192 = vmax.f32 %v191, 0.0
    %v193 = vlaneseq
    %v194 = vshrl.u32 %v193, 7
    %v195 = vsub.s32 1, %v194
    %v196 = vrot.slane %v27, %v195
    %vm197 = vcmask 261120
    %v199 = vsel %vm197, %v192, 0
    %201 = vmatprep.subr.mxu0 0.0
    %202 = vmatpush1.msra.mxu0 %v23
    %203 = vmatprep.subr.mxu0 0.0
    %204 = vmatpush1.msra.mxu0 %v24
    %205 = vmatprep.subr.mxu0 0.0
    %206 = vmatpush1.msra.mxu0 %v25
    %207 = vmatprep.subr.mxu0 0.0
    %208 = vmatpush1.msra.mxu0 %v26
    %209 = vmatprep.subr.mxu0 0.0
    %210 = vmatpush1.msra.mxu0 0.0
    %211 = vmatprep.subr.mxu0 0.0
    %212 = vmatpush1.msra.mxu0 0.0
    %213 = vmatprep.subr.mxu0 0.0
    %214 = vmatpush1.msra.mxu0 0.0
    %215 = vmatprep.subr.mxu0 0.0
    %216 = vmatpush1.msra.mxu0 0.0
    %217 = vmatprep.subr.mxu0 0.0
    %218 = vmatpush1.msra.mxu0 0.0
    %219 = vmatprep.subr.mxu0 0.0
    %220 = vmatpush1.msra.mxu0 0.0
    %221 = vmatprep.subr.mxu0 0.0
    %222 = vmatpush1.msra.mxu0 0.0
    %223 = vmatprep.subr.mxu0 0.0
    %224 = vmatpush1.msra.mxu0 0.0
    %225 = vmatprep.subr.mxu0 0.0
    %226 = vmatpush1.msra.mxu0 0.0
    %227 = vmatprep.subr.mxu0 0.0
    %228 = vmatpush1.msra.mxu0 0.0
    %229 = vmatprep.subr.mxu0 0.0
    %230 = vmatpush1.msra.mxu0 0.0
    %231 = vmatprep.subr.mxu0 0.0
    %232 = vmatpush1.msra.mxu0 0.0
    %233 = vmatprep.subr.mxu0 0.0
    %234 = vmatpush1.msra.mxu0 0.0
    %235 = vmatprep.subr.mxu0 0.0
    %236 = vmatpush1.msra.mxu0 0.0
    %237 = vmatprep.subr.mxu0 0.0
    %238 = vmatpush1.msra.mxu0 0.0
    %239 = vmatprep.subr.mxu0 0.0
    %240 = vmatpush1.msra.mxu0 0.0
    %241 = vmatprep.subr.mxu0 0.0
    %242 = vmatpush1.msra.mxu0 0.0
    %243 = vmatprep.subr.mxu0 0.0
    %244 = vmatpush1.msra.mxu0 0.0
    %245 = vmatprep.subr.mxu0 0.0
    %246 = vmatpush1.msra.mxu0 0.0
    %247 = vmatprep.subr.mxu0 0.0
    %248 = vmatpush1.msra.mxu0 0.0
    %249 = vmatprep.subr.mxu0 0.0
    %250 = vmatpush1.msra.mxu0 0.0
    %251 = vmatprep.subr.mxu0 0.0
    %252 = vmatpush1.msra.mxu0 0.0
    %253 = vmatprep.subr.mxu0 0.0
    %254 = vmatpush1.msra.mxu0 0.0
    %255 = vmatprep.subr.mxu0 0.0
    %256 = vmatpush1.msra.mxu0 0.0
    %257 = vmatprep.subr.mxu0 0.0
    %258 = vmatpush1.msra.mxu0 0.0
    %259 = vmatprep.subr.mxu0 0.0
    %260 = vmatpush1.msra.mxu0 0.0
    %261 = vmatprep.subr.mxu0 0.0
    %262 = vmatpush1.msra.mxu0 0.0
    %263 = vmatprep.subr.mxu0 0.0
    %264 = vmatpush1.msra.mxu0 0.0
    %265 = vmatprep.mubr.f32.mxu0 0.0
    %266 = vmatmul.mubr.f32.gmra.mrb[0].mxu0 %v199
    %v267 = vpop.f32.mrb[0].mxu0
    %v268 = vadd.f32 %v196, %v267
    %v269 = vpop.f32.mrb[0].mxu0
    %270 = vdwg.mxu0
    %v271 = vmax.f32 %v268, 0.0
    %273 = vset.pattern.permute.xlu0 0
    %274 = vperm.xlu0 %273, %v27
    %v275 = vpop.permute.xlu0 %274
    %v276 = vrot.slane %v27, 2
    %v277 = vrot.slane %v275, 3
    %v279 = vsel %vm197, %v276, 0
    %v282 = vsel %vm197, %v271, 0
    %284 = vmatprep.subr.mxu0 0.0
    %285 = vmatpush1.xpose.msra.mxu0 %v282
    %286 = vmatprep.subr.mxu0 0.0
    %287 = vmatpush1.xpose.msra.mxu0 0.0
    %288 = vmatprep.subr.mxu0 0.0
    %289 = vmatpush1.xpose.msra.mxu0 0.0
    %290 = vmatprep.subr.mxu0 0.0
    %291 = vmatpush1.xpose.msra.mxu0 0.0
    %292 = vmatprep.subr.mxu0 0.0
    %293 = vmatpush1.xpose.msra.mxu0 0.0
    %294 = vmatprep.subr.mxu0 0.0
    %295 = vmatpush1.xpose.msra.mxu0 0.0
    %296 = vmatprep.subr.mxu0 0.0
    %297 = vmatpush1.xpose.msra.mxu0 0.0
    %298 = vmatprep.subr.mxu0 0.0
    %299 = vmatpush1.xpose.msra.mxu0 0.0
    %300 = vmatprep.subr.mxu0 0.0
    %301 = vmatpush1.xpose.msra.mxu0 0.0
    %302 = vmatprep.subr.mxu0 0.0
    %303 = vmatpush1.xpose.msra.mxu0 0.0
    %304 = vmatprep.subr.mxu0 0.0
    %305 = vmatpush1.xpose.msra.mxu0 0.0
    %306 = vmatprep.subr.mxu0 0.0
    %307 = vmatpush1.xpose.msra.mxu0 0.0
    %308 = vmatprep.subr.mxu0 0.0
    %309 = vmatpush1.xpose.msra.mxu0 0.0
    %310 = vmatprep.subr.mxu0 0.0
    %311 = vmatpush1.xpose.msra.mxu0 0.0
    %312 = vmatprep.subr.mxu0 0.0
    %313 = vmatpush1.xpose.msra.mxu0 0.0
    %314 = vmatprep.subr.mxu0 0.0
    %315 = vmatpush1.xpose.msra.mxu0 0.0
    %316 = vmatprep.subr.mxu0 0.0
    %317 = vmatpush1.xpose.msra.mxu0 0.0
    %318 = vmatprep.subr.mxu0 0.0
    %319 = vmatpush1.xpose.msra.mxu0 0.0
    %320 = vmatprep.subr.mxu0 0.0
    %321 = vmatpush1.xpose.msra.mxu0 0.0
    %322 = vmatprep.subr.mxu0 0.0
    %323 = vmatpush1.xpose.msra.mxu0 0.0
    %324 = vmatprep.subr.mxu0 0.0
    %325 = vmatpush1.xpose.msra.mxu0 0.0
    %326 = vmatprep.subr.mxu0 0.0
    %327 = vmatpush1.xpose.msra.mxu0 0.0
    %328 = vmatprep.subr.mxu0 0.0
    %329 = vmatpush1.xpose.msra.mxu0 0.0
    %330 = vmatprep.subr.mxu0 0.0
    %331 = vmatpush1.xpose.msra.mxu0 0.0
    %332 = vmatprep.subr.mxu0 0.0
    %333 = vmatpush1.xpose.msra.mxu0 0.0
    %334 = vmatprep.subr.mxu0 0.0
    %335 = vmatpush1.xpose.msra.mxu0 0.0
    %336 = vmatprep.subr.mxu0 0.0
    %337 = vmatpush1.xpose.msra.mxu0 0.0
    %338 = vmatprep.subr.mxu0 0.0
    %339 = vmatpush1.xpose.msra.mxu0 0.0
    %340 = vmatprep.subr.mxu0 0.0
    %341 = vmatpush1.xpose.msra.mxu0 0.0
    %342 = vmatprep.subr.mxu0 0.0
    %343 = vmatpush1.xpose.msra.mxu0 0.0
    %344 = vmatprep.subr.mxu0 0.0
    %345 = vmatpush1.xpose.msra.mxu0 0.0
    %346 = vmatprep.subr.mxu0 0.0
    %347 = vmatpush1.xpose.msra.mxu0 0.0
    %348 = vmatprep.mubr.f32.mxu0 0.0
    %349 = vmatmul.mubr.f32.gmra.mrb[0].mxu0 %v279
    %v350 = vpop.f32.mrb[0].mxu0
    %v351 = vadd.f32 %v277, %v350
    %v352 = vpop.f32.mrb[0].mxu0
    %353 = vdwg.mxu0
    %v354 = vlaneseq
    %v355 = vshrl.u32 %v354, 7
    %v356 = vsub.s32 0, %v355
    %v357 = vrot.slane %v34, %v356
    %358 = vmatprep.subr.mxu0 0.0
    %359 = vmatpush1.msra.mxu0 %v28
    %360 = vmatprep.subr.mxu0 0.0
    %361 = vmatpush1.msra.mxu0 %v29
    %362 = vmatprep.subr.mxu0 0.0
    %363 = vmatpush1.msra.mxu0 0.0
    %364 = vmatprep.subr.mxu0 0.0
    %365 = vmatpush1.msra.mxu0 0.0
    %366 = vmatprep.subr.mxu0 0.0
    %367 = vmatpush1.msra.mxu0 0.0
    %368 = vmatprep.subr.mxu0 0.0
    %369 = vmatpush1.msra.mxu0 0.0
    %370 = vmatprep.subr.mxu0 0.0
    %371 = vmatpush1.msra.mxu0 0.0
    %372 = vmatprep.subr.mxu0 0.0
    %373 = vmatpush1.msra.mxu0 0.0
    %374 = vmatprep.subr.mxu0 0.0
    %375 = vmatpush1.msra.mxu0 0.0
    %376 = vmatprep.subr.mxu0 0.0
    %377 = vmatpush1.msra.mxu0 0.0
    %378 = vmatprep.subr.mxu0 0.0
    %379 = vmatpush1.msra.mxu0 0.0
    %380 = vmatprep.subr.mxu0 0.0
    %381 = vmatpush1.msra.mxu0 0.0
    %382 = vmatprep.subr.mxu0 0.0
    %383 = vmatpush1.msra.mxu0 0.0
    %384 = vmatprep.subr.mxu0 0.0
    %385 = vmatpush1.msra.mxu0 0.0
    %386 = vmatprep.subr.mxu0 0.0
    %387 = vmatpush1.msra.mxu0 0.0
    %388 = vmatprep.subr.mxu0 0.0
    %389 = vmatpush1.msra.mxu0 0.0
    %390 = vmatprep.subr.mxu0 0.0
    %391 = vmatpush1.msra.mxu0 0.0
    %392 = vmatprep.subr.mxu0 0.0
    %393 = vmatpush1.msra.mxu0 0.0
    %394 = vmatprep.subr.mxu0 0.0
    %395 = vmatpush1.msra.mxu0 0.0
    %396 = vmatprep.subr.mxu0 0.0
    %397 = vmatpush1.msra.mxu0 0.0
    %398 = vmatprep.subr.mxu0 0.0
    %399 = vmatpush1.msra.mxu0 0.0
    %400 = vmatprep.subr.mxu0 0.0
    %401 = vmatpush1.msra.mxu0 0.0
    %402 = vmatprep.subr.mxu0 0.0
    %403 = vmatpush1.msra.mxu0 0.0
    %404 = vmatprep.subr.mxu0 0.0
    %405 = vmatpush1.msra.mxu0 0.0
    %406 = vmatprep.subr.mxu0 0.0
    %407 = vmatpush1.msra.mxu0 0.0
    %408 = vmatprep.subr.mxu0 0.0
    %409 = vmatpush1.msra.mxu0 0.0
    %410 = vmatprep.subr.mxu0 0.0
    %411 = vmatpush1.msra.mxu0 0.0
    %412 = vmatprep.subr.mxu0 0.0
    %413 = vmatpush1.msra.mxu0 0.0
    %414 = vmatprep.subr.mxu0 0.0
    %415 = vmatpush1.msra.mxu0 0.0
    %416 = vmatprep.subr.mxu0 0.0
    %417 = vmatpush1.msra.mxu0 0.0
    %418 = vmatprep.subr.mxu0 0.0
    %419 = vmatpush1.msra.mxu0 0.0
    %420 = vmatprep.subr.mxu0 0.0
    %421 = vmatpush1.msra.mxu0 0.0
    %422 = vmatprep.mubr.f32.mxu0 0.0
    %423 = vmatmul.mubr.f32.gmra.mrb[0].mxu0 %v115
    %v424 = vpop.f32.mrb[0].mxu0
    %v425 = vadd.f32 %v357, %v424
    %v426 = vpop.f32.mrb[0].mxu0
    %427 = vdwg.mxu0
    %v428 = vmax.f32 %v425, 0.0
    %v429 = vlaneseq
    %v430 = vshrl.u32 %v429, 7
    %v431 = vsub.s32 1, %v430
    %v432 = vrot.slane %v34, %v431
    %v434 = vsel %vm197, %v428, 0
    %436 = vmatprep.subr.mxu0 0.0
    %437 = vmatpush1.msra.mxu0 %v30
    %438 = vmatprep.subr.mxu0 0.0
    %439 = vmatpush1.msra.mxu0 %v31
    %440 = vmatprep.subr.mxu0 0.0
    %441 = vmatpush1.msra.mxu0 %v32
    %442 = vmatprep.subr.mxu0 0.0
    %443 = vmatpush1.msra.mxu0 %v33
    %444 = vmatprep.subr.mxu0 0.0
    %445 = vmatpush1.msra.mxu0 0.0
    %446 = vmatprep.subr.mxu0 0.0
    %447 = vmatpush1.msra.mxu0 0.0
    %448 = vmatprep.subr.mxu0 0.0
    %449 = vmatpush1.msra.mxu0 0.0
    %450 = vmatprep.subr.mxu0 0.0
    %451 = vmatpush1.msra.mxu0 0.0
    %452 = vmatprep.subr.mxu0 0.0
    %453 = vmatpush1.msra.mxu0 0.0
    %454 = vmatprep.subr.mxu0 0.0
    %455 = vmatpush1.msra.mxu0 0.0
    %456 = vmatprep.subr.mxu0 0.0
    %457 = vmatpush1.msra.mxu0 0.0
    %458 = vmatprep.subr.mxu0 0.0
    %459 = vmatpush1.msra.mxu0 0.0
    %460 = vmatprep.subr.mxu0 0.0
    %461 = vmatpush1.msra.mxu0 0.0
    %462 = vmatprep.subr.mxu0 0.0
    %463 = vmatpush1.msra.mxu0 0.0
    %464 = vmatprep.subr.mxu0 0.0
    %465 = vmatpush1.msra.mxu0 0.0
    %466 = vmatprep.subr.mxu0 0.0
    %467 = vmatpush1.msra.mxu0 0.0
    %468 = vmatprep.subr.mxu0 0.0
    %469 = vmatpush1.msra.mxu0 0.0
    %470 = vmatprep.subr.mxu0 0.0
    %471 = vmatpush1.msra.mxu0 0.0
    %472 = vmatprep.subr.mxu0 0.0
    %473 = vmatpush1.msra.mxu0 0.0
    %474 = vmatprep.subr.mxu0 0.0
    %475 = vmatpush1.msra.mxu0 0.0
    %476 = vmatprep.subr.mxu0 0.0
    %477 = vmatpush1.msra.mxu0 0.0
    %478 = vmatprep.subr.mxu0 0.0
    %479 = vmatpush1.msra.mxu0 0.0
    %480 = vmatprep.subr.mxu0 0.0
    %481 = vmatpush1.msra.mxu0 0.0
    %482 = vmatprep.subr.mxu0 0.0
    %483 = vmatpush1.msra.mxu0 0.0
    %484 = vmatprep.subr.mxu0 0.0
    %485 = vmatpush1.msra.mxu0 0.0
    %486 = vmatprep.subr.mxu0 0.0
    %487 = vmatpush1.msra.mxu0 0.0
    %488 = vmatprep.subr.mxu0 0.0
    %489 = vmatpush1.msra.mxu0 0.0
    %490 = vmatprep.subr.mxu0 0.0
    %491 = vmatpush1.msra.mxu0 0.0
    %492 = vmatprep.subr.mxu0 0.0
    %493 = vmatpush1.msra.mxu0 0.0
    %494 = vmatprep.subr.mxu0 0.0
    %495 = vmatpush1.msra.mxu0 0.0
    %496 = vmatprep.subr.mxu0 0.0
    %497 = vmatpush1.msra.mxu0 0.0
    %498 = vmatprep.subr.mxu0 0.0
    %499 = vmatpush1.msra.mxu0 0.0
    %500 = vmatprep.mubr.f32.mxu0 0.0
    %501 = vmatmul.mubr.f32.gmra.mrb[0].mxu0 %v434
    %v502 = vpop.f32.mrb[0].mxu0
    %v503 = vadd.f32 %v432, %v502
    %v504 = vpop.f32.mrb[0].mxu0
    %505 = vdwg.mxu0
    %v506 = vmax.f32 %v503, 0.0
    %508 = vset.pattern.permute.xlu0 0
    %509 = vperm.xlu0 %508, %v34
    %v510 = vpop.permute.xlu0 %509
    %v511 = vrot.slane %v34, 2
    %v512 = vrot.slane %v510, 3
    %v514 = vsel %vm197, %v511, 0
    %v517 = vsel %vm197, %v506, 0
    %519 = vmatprep.subr.mxu0 0.0
    %520 = vmatpush1.xpose.msra.mxu0 %v517
    %521 = vmatprep.subr.mxu0 0.0
    %522 = vmatpush1.xpose.msra.mxu0 0.0
    %523 = vmatprep.subr.mxu0 0.0
    %524 = vmatpush1.xpose.msra.mxu0 0.0
    %525 = vmatprep.subr.mxu0 0.0
    %526 = vmatpush1.xpose.msra.mxu0 0.0
    %527 = vmatprep.subr.mxu0 0.0
    %528 = vmatpush1.xpose.msra.mxu0 0.0
    %529 = vmatprep.subr.mxu0 0.0
    %530 = vmatpush1.xpose.msra.mxu0 0.0
    %531 = vmatprep.subr.mxu0 0.0
    %532 = vmatpush1.xpose.msra.mxu0 0.0
    %533 = vmatprep.subr.mxu0 0.0
    %534 = vmatpush1.xpose.msra.mxu0 0.0
    %535 = vmatprep.subr.mxu0 0.0
    %536 = vmatpush1.xpose.msra.mxu0 0.0
    %537 = vmatprep.subr.mxu0 0.0
    %538 = vmatpush1.xpose.msra.mxu0 0.0
    %539 = vmatprep.subr.mxu0 0.0
    %540 = vmatpush1.xpose.msra.mxu0 0.0
    %541 = vmatprep.subr.mxu0 0.0
    %542 = vmatpush1.xpose.msra.mxu0 0.0
    %543 = vmatprep.subr.mxu0 0.0
    %544 = vmatpush1.xpose.msra.mxu0 0.0
    %545 = vmatprep.subr.mxu0 0.0
    %546 = vmatpush1.xpose.msra.mxu0 0.0
    %547 = vmatprep.subr.mxu0 0.0
    %548 = vmatpush1.xpose.msra.mxu0 0.0
    %549 = vmatprep.subr.mxu0 0.0
    %550 = vmatpush1.xpose.msra.mxu0 0.0
    %551 = vmatprep.subr.mxu0 0.0
    %552 = vmatpush1.xpose.msra.mxu0 0.0
    %553 = vmatprep.subr.mxu0 0.0
    %554 = vmatpush1.xpose.msra.mxu0 0.0
    %555 = vmatprep.subr.mxu0 0.0
    %556 = vmatpush1.xpose.msra.mxu0 0.0
    %557 = vmatprep.subr.mxu0 0.0
    %558 = vmatpush1.xpose.msra.mxu0 0.0
    %559 = vmatprep.subr.mxu0 0.0
    %560 = vmatpush1.xpose.msra.mxu0 0.0
    %561 = vmatprep.subr.mxu0 0.0
    %562 = vmatpush1.xpose.msra.mxu0 0.0
    %563 = vmatprep.subr.mxu0 0.0
    %564 = vmatpush1.xpose.msra.mxu0 0.0
    %565 = vmatprep.subr.mxu0 0.0
    %566 = vmatpush1.xpose.msra.mxu0 0.0
    %567 = vmatprep.subr.mxu0 0.0
    %568 = vmatpush1.xpose.msra.mxu0 0.0
    %569 = vmatprep.subr.mxu0 0.0
    %570 = vmatpush1.xpose.msra.mxu0 0.0
    %571 = vmatprep.subr.mxu0 0.0
    %572 = vmatpush1.xpose.msra.mxu0 0.0
    %573 = vmatprep.subr.mxu0 0.0
    %574 = vmatpush1.xpose.msra.mxu0 0.0
    %575 = vmatprep.subr.mxu0 0.0
    %576 = vmatpush1.xpose.msra.mxu0 0.0
    %577 = vmatprep.subr.mxu0 0.0
    %578 = vmatpush1.xpose.msra.mxu0 0.0
    %579 = vmatprep.subr.mxu0 0.0
    %580 = vmatpush1.xpose.msra.mxu0 0.0
    %581 = vmatprep.subr.mxu0 0.0
    %582 = vmatpush1.xpose.msra.mxu0 0.0
    %583 = vmatprep.mubr.f32.mxu0 0.0
    %584 = vmatmul.mubr.f32.gmra.mrb[0].mxu0 %v514
    %v585 = vpop.f32.mrb[0].mxu0
    %v586 = vadd.f32 %v512, %v585
    %v587 = vpop.f32.mrb[0].mxu0
    %588 = vdwg.mxu0
    %v590 = vrot.slane %v586, 7
    %vm592 = vcmask 1040384
    %v593 = vsel %vm592, %v351, %v590
    %vm594 = vcmask 58368
    %595 = vst.msk [vmem:[#allocation2] sm:$0x3] %vm594, %v593
    // Predicated region
    $region18: #{tpu_custom_call.1} parent=1 // pred_check
      _
    $region19: #{tpu_custom_call.1} parent=1 // pred_check_branch
      %597 = sbr.rel (0) target = $region21
    $region20: #{tpu_custom_call.1} parent=1 // pred_region
      %s599 = ssub.s32 32, 32
      %600 = vsyncadd [#allocation3], %s599
      %s602 = sshll.u32 [#allocation2], 4
      %s603 = int_to_ptr.vmem [resolvable:$true] %s602
      %605 = dma.vmem_to_hbm [thread:$0]  %s603, 32, %s4, [#allocation3]
    $region21: #{tpu_custom_call.1} parent=1 // pred_fallthru
      _
    // Predicated region
    $region22: #{tpu_custom_call.1} parent=1 // pred_check
      _
    $region23: #{tpu_custom_call.1} parent=1 // pred_check_branch
      %607 = sbr.rel (0) target = $region25
    $region24: #{tpu_custom_call.1} parent=1 // pred_region
      %608 = dma.done [#allocation3], 32
    $region25: #{tpu_custom_call.1} parent=1 // pred_fallthru
      _
    %609 = vsyncpa [#allocation3], 1

</llo_original>
